<compile_context>
chip_gen: v5e
topology: v5e:2x2
jax: 0.10.0
libtpu: 0.0.40
codegen_flags: <defaults>
</compile_context>

<pallas_src>
import jax
import jax.numpy as jnp
from jax.experimental import pallas as pl
from jax.experimental.pallas import tpu as pltpu


def _guided_relu_kernel(x_ref, o_ref):
    # Elementwise ReLU on the current VMEM tile (pure VPU streaming work).
    o_ref[...] = jnp.maximum(x_ref[...], jnp.zeros((), dtype=x_ref.dtype))


def guided_backprop_relu(x: jax.Array, *, target_tile_bytes: int = 4 << 20) -> jax.Array:
    """Forward of GuidedBackpropRelU: elementwise max(x, 0). Accepts any shape/dtype."""
    orig_shape = x.shape
    dtype = x.dtype
    total = x.size
    if total == 0:
        return x

    itemsize = jnp.dtype(dtype).itemsize
    # Sublane packing granularity: f32 -> 8, bf16 -> 16, int8/fp8 -> 32.
    sublane = max(8, 32 // itemsize)

    flat = x.reshape(-1)  # metadata-only for contiguous row-major arrays

    # Pick the widest lane-dense slab width that divides the element count so
    # no jnp.pad copy is emitted.  Fall back to a minimal pad to 128.
    lanes = None
    for cand in (4096, 2048, 1024, 512, 256, 128):
        if total % cand == 0:
            lanes = cand
            break
    padded_total = total
    if lanes is None:
        lanes = 128
        padded_total = ((total + lanes - 1) // lanes) * lanes
        flat = jnp.pad(flat, (0, padded_total - total))  # <= 127 extra elements

    rows = padded_total // lanes
    slab = flat.reshape(rows, lanes)

    # Target ~4 MiB tiles (roofline-saturating on v5e/v6e/v7x while staying
    # well inside VMEM budgets with double buffering of in + out).
    target_rows = max(sublane, target_tile_bytes // (lanes * itemsize))
    target_rows = (target_rows // sublane) * sublane
    if rows <= target_rows:
        row_tile = rows  # full-extent block: always a legal block shape
    else:
        row_tile = max(sublane, (target_rows // sublane) * sublane)

    grid = (pl.cdiv(rows, row_tile),)

    out = pl.pallas_call(
        _guided_relu_kernel,
        out_shape=jax.ShapeDtypeStruct((rows, lanes), dtype),
        grid_spec=pltpu.PrefetchScalarGridSpec(
            num_scalar_prefetch=0,
            grid=grid,
            in_specs=[pl.BlockSpec((row_tile, lanes), lambda i: (i, 0))],
            out_specs=pl.BlockSpec((row_tile, lanes), lambda i: (i, 0)),
        ),
        compiler_params=pltpu.CompilerParams(
            dimension_semantics=("parallel",),
            vmem_limit_bytes=48 << 20,
        ),
    )(slab)

    out_flat = out.reshape(-1)
    if padded_total != total:
        out_flat = out_flat[:total]
    return out_flat.reshape(orig_shape)


if __name__ == "__main__":
    key = jax.random.PRNGKey(0)
    # Small NCHW input consistent with a conv-net activation: (B, C, H, W)
    x = jax.random.normal(key, (2, 4, 16, 16), dtype=jnp.float32)

    y = guided_backprop_relu(x)
    y = jax.block_until_ready(y)

    # Reference check against plain JAX ReLU (same semantics as input.clamp(min=0)).
    ref = jnp.maximum(x, 0.0)
    assert y.shape == x.shape and y.dtype == x.dtype
    assert jnp.allclose(y, ref), "mismatch vs reference ReLU"

    print("KERNEL_OK")
</pallas_src>

<mosaic_0001>
module attributes {stable_mosaic.version = 11 : i64} {
  func.func @_guided_relu_kernel(%arg0: i32, %arg1: memref<1x2048xf32, #tpu.memory_space<vmem>>, %arg2: memref<1x2048xf32, #tpu.memory_space<vmem>>) attributes {dimension_semantics = [#tpu.dimension_semantics<parallel>], iteration_bounds = array<i64: 1>, scalar_prefetch = 0 : i64, scratch_operands = 0 : i64, tpu.core_type = #tpu.core_type<tc>, window_params = [{transform_indices = @transform_0, window_bounds = array<i64: 1, 2048>}, {transform_indices = @transform_1, window_bounds = array<i64: 1, 2048>}]} {
    %c0 = arith.constant 0 : index
    %c0_0 = arith.constant 0 : index
    %0 = vector.load %arg1[%c0, %c0_0] : memref<1x2048xf32, #tpu.memory_space<vmem>>, vector<1x2048xf32>
    %cst = arith.constant 0.000000e+00 : f32
    %1 = vector.broadcast %cst : f32 to vector<1x2048xf32>
    %2 = arith.maximumf %0, %1 : vector<1x2048xf32>
    %c0_1 = arith.constant 0 : index
    %c0_2 = arith.constant 0 : index
    %3 = vector.load %arg2[%c0_1, %c0_2] : memref<1x2048xf32, #tpu.memory_space<vmem>>, vector<1x2048xf32>
    tpu.vector_store %arg2[%c0_1, %c0_2], %2 {strides = array<i32>} : memref<1x2048xf32, #tpu.memory_space<vmem>>, vector<1x2048xf32>,
    return
  }
  func.func @transform_0(%arg0: i32) -> (i32, i32) {
    %c0_i32 = arith.constant 0 : i32
    %c0_i32_0 = arith.constant 0 : i32
    return %arg0, %c0_i32 : i32, i32
  }
  func.func @transform_1(%arg0: i32) -> (i32, i32) {
    %c0_i32 = arith.constant 0 : i32
    %c0_i32_0 = arith.constant 0 : i32
    return %arg0, %c0_i32 : i32, i32
  }
}

</mosaic_0001>

<llo_original>
// kernel: tpu_custom_call.1
$region0: #{tpu_custom_call.1}
  #allocation0 [shape = 'u32[]', space=smem, size = 0x4, offset = 0x4, fixed_abs, tag = 'smem constant byte address 0x4 - core index']
  #allocation1 [shape = 'u32[72,128]{1,0:T(1,128)}', space=vmem, size = 0x9000, scoped, tag = 'internal scratch']
  %s0 = inlined_call_operand.hbm [shape: f32[1,2048], index: 0, kind: input, shape index: {}]
  %s1 = inlined_call_operand.hbm [shape: f32[1,2048], index: 1, kind: output, shape index: {}]
  %s2 = sld [smem:[#allocation0]]
  $region18: #{tpu_custom_call.1} parent=0
    _
  %s4 = ssub.s32 1, %s2
  %s5 = scalar_select 0, %s4, %s2
  $region1: #{tpu_custom_call.1} parent=0
    #allocation2 [shape = 'u8[8192]{0}', space=vmem, size = 0x2000, scoped, tag = 'input window, operand 0, single buffered']
    #allocation3 [shape = 's32[1]{0}', space=sflag, size = 0x4, scoped, tag = 'scoped memory for tpu_custom_call.1']
    #allocation4 [shape = 's32[1]{0}', space=sflag, size = 0x4, scoped, tag = 'scoped memory for tpu_custom_call.1']
    #allocation5 [shape = 'u8[8192]{0}', space=vmem, size = 0x2000, scoped, tag = 'output window, operand 0, single buffered']
    %6 = vsyncpa [#allocation3], 0
    %7 = vsyncpa [#allocation4], 0
    // Predicated region
    $region2: #{tpu_custom_call.1} parent=1 // pred_check
      _
    $region3: #{tpu_custom_call.1} parent=1 // pred_check_branch
      %9 = sbr.rel (0) target = $region5
    $region4: #{tpu_custom_call.1} parent=1 // pred_region
      %11 = vsyncadd [#allocation3], 0
      %s13 = sshll.u32 %s0, 4
      %s14 = int_to_ptr.hbm [resolvable:$true] %s13
      %s15 = sshll.u32 [#allocation2], 4
      %s16 = int_to_ptr.vmem [resolvable:$true] %s15
      %18 = dma.hbm_to_vmem [thread:$0]  %s14, 256, %s16, [#allocation3]
    $region5: #{tpu_custom_call.1} parent=1 // pred_fallthru
      _
    // Predicated region
    $region6: #{tpu_custom_call.1} parent=1 // pred_check
      _
    $region7: #{tpu_custom_call.1} parent=1 // pred_check_branch
      %20 = sbr.rel (0) target = $region9
    $region8: #{tpu_custom_call.1} parent=1 // pred_region
      %22 = dma.done [#allocation3], 256
    $region9: #{tpu_custom_call.1} parent=1 // pred_fallthru
      _
    %v23 = vld [vmem:[#allocation2] sm:$0xff]
    %v24 = vld [vmem:[#allocation2 + $0x8] sm:$0xff]
    %v25 = vmax.f32 %v23, 0.0
    %v26 = vmax.f32 %v24, 0.0
    %27 = vst [vmem:[#allocation5] sm:$0xff] %v25
    %28 = vst [vmem:[#allocation5 + $0x8] sm:$0xff] %v26
    // Predicated region
    $region10: #{tpu_custom_call.1} parent=1 // pred_check
      _
    $region11: #{tpu_custom_call.1} parent=1 // pred_check_branch
      %30 = sbr.rel (0) target = $region13
    $region12: #{tpu_custom_call.1} parent=1 // pred_region
      %32 = vsyncadd [#allocation4], 0
      %s34 = sshll.u32 [#allocation5], 4
      %s35 = int_to_ptr.vmem [resolvable:$true] %s34
      %s36 = sshll.u32 %s1, 4
      %s37 = int_to_ptr.hbm [resolvable:$true] %s36
      %39 = dma.vmem_to_hbm [thread:$0]  %s35, 256, %s37, [#allocation4]
    $region13: #{tpu_custom_call.1} parent=1 // pred_fallthru
      _
    // Predicated region
    $region14: #{tpu_custom_call.1} parent=1 // pred_check
      _
    $region15: #{tpu_custom_call.1} parent=1 // pred_check_branch
      %41 = sbr.rel (0) target = $region17
    $region16: #{tpu_custom_call.1} parent=1 // pred_region
      %43 = dma.done [#allocation4], 256
    $region17: #{tpu_custom_call.1} parent=1 // pred_fallthru
      _
    %44 = vsyncpa [#allocation3], 1
    %45 = vsyncpa [#allocation4], 1

</llo_original>
